<compile_context>
chip_gen: v6e
topology: v6e:2x2x1
jax: 0.10.0
libtpu: 0.0.40
codegen_flags: <defaults>
</compile_context>

<pallas_src>
import functools

import jax
import jax.numpy as jnp
from jax.experimental import pallas as pl
from jax.experimental.pallas import tpu as pltpu


def _mha_kernel(x_ref, wqkv_ref, wout_ref, bias_ref, o_ref, *,
                bt: int, n_pad: int, n_valid: int, nhead: int, dim_head: int):
    # x_ref    : (bt*n_pad, D)        rows of `bt` batch elements (compute dtype)
    # wqkv_ref : (D, 3*inner)         fused QKV weights (scale folded into W_q cols)
    # wout_ref : (inner, D)           output projection weights
    # bias_ref : (1, D)               output projection bias (f32)
    # o_ref    : (bt*n_pad, D)        output rows
    inner = nhead * dim_head
    x = x_ref[...]                                                    # (rows, D)
    cdt = x.dtype                                                     # MXU operand dtype

    # --- fused QKV projection: one wide MXU matmul, f32 accumulation --------
    qkv = jnp.dot(x, wqkv_ref[...], preferred_element_type=jnp.float32)  # (rows, 3*inner)

    # Split / reshape / cast ONCE (not per head).
    q3 = qkv[:, :inner].reshape(bt, n_pad, inner).astype(cdt)
    k3 = qkv[:, inner:2 * inner].reshape(bt, n_pad, inner).astype(cdt)
    v3 = qkv[:, 2 * inner:].reshape(bt, n_pad, inner).astype(cdt)

    # Key-padding mask (built only when the sequence was padded; static branch).
    if n_valid != n_pad:
        key_mask = jax.lax.broadcasted_iota(jnp.int32, (1, 1, n_pad), 2) < n_valid

    # --- per-head attention (static, unrolled) -------------------------------
    head_outs = []
    for h in range(nhead):
        lo = h * dim_head
        qh = q3[:, :, lo:lo + dim_head]                               # (bt, n, dh)
        kh = k3[:, :, lo:lo + dim_head]
        vh = v3[:, :, lo:lo + dim_head]

        # Scores: contract head dims directly (no explicit k transpose pass).
        s = jnp.einsum('bid,bjd->bij', qh, kh,
                       preferred_element_type=jnp.float32)            # (bt, n, n)
        if n_valid != n_pad:
            s = jnp.where(key_mask, s, -1e30)

        # Numerically-stable softmax, all elementwise math in f32.
        s = s - jnp.max(s, axis=-1, keepdims=True)
        p = jnp.exp(s)
        p = p * pl.reciprocal(jnp.sum(p, axis=-1, keepdims=True), approx=True)

        head_outs.append(
            jnp.einsum('bij,bjd->bid', p.astype(cdt), vh,
                       preferred_element_type=jnp.float32))           # (bt, n, dh)

    # Concatenate heads in 'b n (h d)' order, then ONE wide output projection.
    attn = jnp.concatenate(head_outs, axis=-1)                        # (bt, n, inner)
    attn = attn.reshape(bt * n_pad, inner).astype(cdt)
    out = jnp.dot(attn, wout_ref[...], preferred_element_type=jnp.float32)
    # Dropout p=0.0 -> identity.
    o_ref[...] = (out + bias_ref[...]).astype(o_ref.dtype)


def _choose_bt(batch: int, n_pad: int, max_rows: int = 1024) -> int:
    """Largest divisor of `batch` giving a row block (bt*n_pad) under the VMEM
    cap while leaving at least 2 grid steps for the parallel batch axis
    (v7x has 2 TensorCores per chip)."""
    cap = max(1, batch // 2)
    best = 1
    for bt in range(1, cap + 1):
        if batch % bt == 0 and bt * n_pad <= max_rows:
            best = bt
    return best


def multi_head_attention(x, w_qkv, w_out, b_out, *, nhead: int, dim_head: int,
                         compute_dtype=jnp.bfloat16):
    """x: (B, N, D); w_qkv: (D, 3*inner); w_out: (inner, D); b_out: (D,)."""
    B, N, D = x.shape
    inner = nhead * dim_head
    scale = float(dim_head) ** -0.5
    out_dtype = x.dtype

    # ---- parameter prep (wrapper side) ------------------------------------
    # Fold the softmax scale into the W_q columns of the fused QKV weight.
    col_scale = jnp.concatenate([jnp.full((inner,), scale, w_qkv.dtype),
                                 jnp.ones((2 * inner,), w_qkv.dtype)])
    wqkv = (w_qkv * col_scale[None, :]).astype(compute_dtype)          # (D, 3*inner)
    wout = w_out.astype(compute_dtype)                                 # (inner, D)
    bias2 = b_out.reshape(1, D).astype(jnp.float32)

    # Pad the sequence to a sublane multiple so row blocks stay layout-legal
    # (ViT N=197-style shapes); padded keys are masked inside the kernel.
    Np = ((N + 7) // 8) * 8
    x_pad = jnp.pad(x, ((0, 0), (0, Np - N), (0, 0))) if Np != N else x
    x2 = x_pad.reshape(B * Np, D).astype(compute_dtype)                # lane axis = D

    Bt = _choose_bt(B, Np)
    rows = Bt * Np
    grid = (B // Bt,)

    kernel = functools.partial(_mha_kernel, bt=Bt, n_pad=Np, n_valid=N,
                               nhead=nhead, dim_head=dim_head)

    itemsize = jnp.dtype(compute_dtype).itemsize
    cost = pl.CostEstimate(
        flops=(2 * B * Np * D * 3 * inner              # fused QKV projection
               + 4 * B * nhead * Np * Np * dim_head    # scores + PV
               + 2 * B * Np * inner * D),              # output projection
        transcendentals=B * nhead * Np * Np,           # exp in softmax
        bytes_accessed=(x2.size * itemsize
                        + (wqkv.size + wout.size) * itemsize   # fetched once (constant index)
                        + bias2.size * 4
                        + B * Np * D * jnp.dtype(out_dtype).itemsize),
    )

    out2 = pl.pallas_call(
        kernel,
        out_shape=jax.ShapeDtypeStruct((B * Np, D), out_dtype),
        grid_spec=pltpu.PrefetchScalarGridSpec(
            num_scalar_prefetch=0,
            grid=grid,
            in_specs=[
                pl.BlockSpec((rows, D), lambda b: (b, 0)),             # x rows
                pl.BlockSpec((D, 3 * inner), lambda b: (0, 0)),        # W_qkv (resident)
                pl.BlockSpec((inner, D), lambda b: (0, 0)),            # W_out (resident)
                pl.BlockSpec((1, D), lambda b: (0, 0)),                # bias (resident)
            ],
            out_specs=pl.BlockSpec((rows, D), lambda b: (b, 0)),
        ),
        compiler_params=pltpu.CompilerParams(
            dimension_semantics=("parallel",),
            vmem_limit_bytes=48 * 1024 * 1024),
        cost_estimate=cost,
    )(x2, wqkv, wout, bias2)

    # TODO(synk): nonzero-p training dropout would need pltpu.prng_seed /
    # prng_random_bits inside the kernel (p=0.0 here -> identity).
    # TODO(synk): for long sequences, tile queries flash-style instead of
    # materializing the full (n, n) score matrix per head.
    out = out2.reshape(B, Np, D)
    return out[:, :N, :] if Np != N else out


def _reference(x, w_qkv, w_out, b_out, *, nhead, dim_head):
    B, N, D = x.shape
    inner = nhead * dim_head
    scale = float(dim_head) ** -0.5
    qkv = jnp.einsum('bnd,de->bne', x, w_qkv)
    q, k, v = jnp.split(qkv, 3, axis=-1)

    def to_heads(t):
        return t.reshape(B, N, nhead, dim_head).transpose(0, 2, 1, 3)   # b h n d

    q, k, v = map(to_heads, (q, k, v))
    dots = jnp.einsum('bhid,bhjd->bhij', q, k) * scale
    atten = jax.nn.softmax(dots, axis=-1)
    out = jnp.einsum('bhij,bhjd->bhid', atten, v)
    out = out.transpose(0, 2, 1, 3).reshape(B, N, inner)                 # b n (h d)
    return jnp.einsum('bni,id->bnd', out, w_out) + b_out


if __name__ == "__main__":
    # Small shapes consistent with the module:
    # patch_dim=32, nhead=4, dim_head=8 -> inner=32; batch=2, seq=8.
    B, N, D = 2, 8, 32
    NHEAD, DIM_HEAD = 4, 8
    INNER = NHEAD * DIM_HEAD

    key = jax.random.PRNGKey(0)
    kx, kq, kw, kb = jax.random.split(key, 4)
    x = jax.random.normal(kx, (B, N, D), dtype=jnp.float32)
    w_qkv = jax.random.normal(kq, (D, 3 * INNER), dtype=jnp.float32) * 0.05
    w_out = jax.random.normal(kw, (INNER, D), dtype=jnp.float32) * 0.05
    b_out = jax.random.normal(kb, (D,), dtype=jnp.float32) * 0.05

    out = multi_head_attention(x, w_qkv, w_out, b_out,
                               nhead=NHEAD, dim_head=DIM_HEAD)
    out = jax.block_until_ready(out)

    ref = _reference(x, w_qkv, w_out, b_out, nhead=NHEAD, dim_head=DIM_HEAD)
    assert out.shape == (B, N, D)
    # Tolerance accounts for bf16 MXU operands + approx EUP reciprocal.
    assert jnp.allclose(out, ref, atol=2e-2, rtol=2e-2), (
        float(jnp.max(jnp.abs(out - ref))))

    print("KERNEL_OK")
</pallas_src>

<mosaic_0001>
module attributes {stable_mosaic.version = 11 : i64} {
  func.func @_mha_kernel(%arg0: i32, %arg1: memref<8x32xbf16, #tpu.memory_space<vmem>>, %arg2: memref<32x96xbf16, #tpu.memory_space<vmem>>, %arg3: memref<32x32xbf16, #tpu.memory_space<vmem>>, %arg4: memref<1x32xf32, #tpu.memory_space<vmem>>, %arg5: memref<8x32xf32, #tpu.memory_space<vmem>>) attributes {dimension_semantics = [#tpu.dimension_semantics<parallel>], iteration_bounds = array<i64: 2>, scalar_prefetch = 0 : i64, scratch_operands = 0 : i64, tpu.core_type = #tpu.core_type<tc>, window_params = [{transform_indices = @transform_0, window_bounds = array<i64: 8, 32>}, {pipeline_mode = #tpu.pipeline_mode<synchronous>, transform_indices = @transform_1, window_bounds = array<i64: 32, 96>}, {pipeline_mode = #tpu.pipeline_mode<synchronous>, transform_indices = @transform_2, window_bounds = array<i64: 32, 32>}, {pipeline_mode = #tpu.pipeline_mode<synchronous>, transform_indices = @transform_3, window_bounds = array<i64: 1, 32>}, {transform_indices = @transform_4, window_bounds = array<i64: 8, 32>}]} {
    %c0 = arith.constant 0 : index
    %c0_0 = arith.constant 0 : index
    %0 = vector.load %arg1[%c0, %c0_0] : memref<8x32xbf16, #tpu.memory_space<vmem>>, vector<8x32xbf16>
    %c0_1 = arith.constant 0 : index
    %c0_2 = arith.constant 0 : index
    %1 = vector.load %arg2[%c0_1, %c0_2] : memref<32x96xbf16, #tpu.memory_space<vmem>>, vector<32x96xbf16>
    %cst = arith.constant dense<0.000000e+00> : vector<8x96xf32>
    %2 = tpu.matmul %0, %1, %cst {dimension_numbers = #tpu.dot_dimension_numbers<[1], [0], [0], [1], [0, 0, 1, 1], [], []>} : vector<8x32xbf16>, vector<32x96xbf16>, vector<8x96xf32> -> vector<8x96xf32>
    %3 = vector.extract_strided_slice %2 {offsets = [0, 0], sizes = [8, 32], strides = [1, 1]} : vector<8x96xf32> to vector<8x32xf32>
    %4 = vector.shape_cast %3 : vector<8x32xf32> to vector<1x8x32xf32>
    %5 = arith.truncf %4 : vector<1x8x32xf32> to vector<1x8x32xbf16>
    %6 = vector.extract_strided_slice %2 {offsets = [0, 32], sizes = [8, 32], strides = [1, 1]} : vector<8x96xf32> to vector<8x32xf32>
    %7 = vector.shape_cast %6 : vector<8x32xf32> to vector<1x8x32xf32>
    %8 = arith.truncf %7 : vector<1x8x32xf32> to vector<1x8x32xbf16>
    %9 = vector.extract_strided_slice %2 {offsets = [0, 64], sizes = [8, 32], strides = [1, 1]} : vector<8x96xf32> to vector<8x32xf32>
    %10 = vector.shape_cast %9 : vector<8x32xf32> to vector<1x8x32xf32>
    %11 = arith.truncf %10 : vector<1x8x32xf32> to vector<1x8x32xbf16>
    %12 = vector.extract_strided_slice %5 {offsets = [0, 0, 0], sizes = [1, 8, 8], strides = [1, 1, 1]} : vector<1x8x32xbf16> to vector<1x8x8xbf16>
    %13 = vector.extract_strided_slice %8 {offsets = [0, 0, 0], sizes = [1, 8, 8], strides = [1, 1, 1]} : vector<1x8x32xbf16> to vector<1x8x8xbf16>
    %14 = vector.extract_strided_slice %11 {offsets = [0, 0, 0], sizes = [1, 8, 8], strides = [1, 1, 1]} : vector<1x8x32xbf16> to vector<1x8x8xbf16>
    "tpu.trace_start"() <{level = 10 : i32, message = "bid,bjd->bij"}> : () -> ()
    %cst_3 = arith.constant dense<0.000000e+00> : vector<1x8x8xf32>
    %15 = tpu.matmul %12, %13, %cst_3 {dimension_numbers = #tpu.dot_dimension_numbers<[2], [2], [1], [1], [0, 0, 0, 1, 1, 1], [0], [0]>} : vector<1x8x8xbf16>, vector<1x8x8xbf16>, vector<1x8x8xf32> -> vector<1x8x8xf32>
    "tpu.trace_stop"() : () -> ()
    %cst_4 = arith.constant dense<0xFF800000> : vector<1x8xf32>
    %16 = vector.multi_reduction <maximumf>, %15, %cst_4 [2] : vector<1x8x8xf32> to vector<1x8xf32>
    %17 = vector.shape_cast %16 : vector<1x8xf32> to vector<1x8x1xf32>
    %18 = vector.broadcast %17 : vector<1x8x1xf32> to vector<1x8x8xf32>
    %19 = arith.subf %15, %18 : vector<1x8x8xf32>
    %20 = math.exp %19 : vector<1x8x8xf32>
    %cst_5 = arith.constant dense<0.000000e+00> : vector<1x8xf32>
    %21 = vector.multi_reduction <add>, %20, %cst_5 [2] : vector<1x8x8xf32> to vector<1x8xf32>
    %22 = vector.shape_cast %21 : vector<1x8xf32> to vector<1x8x1xf32>
    %23 = tpu.reciprocal %22 {approx = true} : vector<1x8x1xf32> -> vector<1x8x1xf32>
    %24 = vector.broadcast %23 : vector<1x8x1xf32> to vector<1x8x8xf32>
    %25 = arith.mulf %20, %24 : vector<1x8x8xf32>
    %26 = arith.truncf %25 : vector<1x8x8xf32> to vector<1x8x8xbf16>
    "tpu.trace_start"() <{level = 10 : i32, message = "bij,bjd->bid"}> : () -> ()
    %cst_6 = arith.constant dense<0.000000e+00> : vector<1x8x8xf32>
    %27 = tpu.matmul %26, %14, %cst_6 {dimension_numbers = #tpu.dot_dimension_numbers<[2], [1], [1], [2], [0, 0, 0, 1, 1, 2], [0], [0]>} : vector<1x8x8xbf16>, vector<1x8x8xbf16>, vector<1x8x8xf32> -> vector<1x8x8xf32>
    "tpu.trace_stop"() : () -> ()
    %28 = vector.extract_strided_slice %5 {offsets = [0, 0, 8], sizes = [1, 8, 8], strides = [1, 1, 1]} : vector<1x8x32xbf16> to vector<1x8x8xbf16>
    %29 = vector.extract_strided_slice %8 {offsets = [0, 0, 8], sizes = [1, 8, 8], strides = [1, 1, 1]} : vector<1x8x32xbf16> to vector<1x8x8xbf16>
    %30 = vector.extract_strided_slice %11 {offsets = [0, 0, 8], sizes = [1, 8, 8], strides = [1, 1, 1]} : vector<1x8x32xbf16> to vector<1x8x8xbf16>
    "tpu.trace_start"() <{level = 10 : i32, message = "bid,bjd->bij"}> : () -> ()
    %cst_7 = arith.constant dense<0.000000e+00> : vector<1x8x8xf32>
    %31 = tpu.matmul %28, %29, %cst_7 {dimension_numbers = #tpu.dot_dimension_numbers<[2], [2], [1], [1], [0, 0, 0, 1, 1, 1], [0], [0]>} : vector<1x8x8xbf16>, vector<1x8x8xbf16>, vector<1x8x8xf32> -> vector<1x8x8xf32>
    "tpu.trace_stop"() : () -> ()
    %cst_8 = arith.constant dense<0xFF800000> : vector<1x8xf32>
    %32 = vector.multi_reduction <maximumf>, %31, %cst_8 [2] : vector<1x8x8xf32> to vector<1x8xf32>
    %33 = vector.shape_cast %32 : vector<1x8xf32> to vector<1x8x1xf32>
    %34 = vector.broadcast %33 : vector<1x8x1xf32> to vector<1x8x8xf32>
    %35 = arith.subf %31, %34 : vector<1x8x8xf32>
    %36 = math.exp %35 : vector<1x8x8xf32>
    %cst_9 = arith.constant dense<0.000000e+00> : vector<1x8xf32>
    %37 = vector.multi_reduction <add>, %36, %cst_9 [2] : vector<1x8x8xf32> to vector<1x8xf32>
    %38 = vector.shape_cast %37 : vector<1x8xf32> to vector<1x8x1xf32>
    %39 = tpu.reciprocal %38 {approx = true} : vector<1x8x1xf32> -> vector<1x8x1xf32>
    %40 = vector.broadcast %39 : vector<1x8x1xf32> to vector<1x8x8xf32>
    %41 = arith.mulf %36, %40 : vector<1x8x8xf32>
    %42 = arith.truncf %41 : vector<1x8x8xf32> to vector<1x8x8xbf16>
    "tpu.trace_start"() <{level = 10 : i32, message = "bij,bjd->bid"}> : () -> ()
    %cst_10 = arith.constant dense<0.000000e+00> : vector<1x8x8xf32>
    %43 = tpu.matmul %42, %30, %cst_10 {dimension_numbers = #tpu.dot_dimension_numbers<[2], [1], [1], [2], [0, 0, 0, 1, 1, 2], [0], [0]>} : vector<1x8x8xbf16>, vector<1x8x8xbf16>, vector<1x8x8xf32> -> vector<1x8x8xf32>
    "tpu.trace_stop"() : () -> ()
    %44 = vector.extract_strided_slice %5 {offsets = [0, 0, 16], sizes = [1, 8, 8], strides = [1, 1, 1]} : vector<1x8x32xbf16> to vector<1x8x8xbf16>
    %45 = vector.extract_strided_slice %8 {offsets = [0, 0, 16], sizes = [1, 8, 8], strides = [1, 1, 1]} : vector<1x8x32xbf16> to vector<1x8x8xbf16>
    %46 = vector.extract_strided_slice %11 {offsets = [0, 0, 16], sizes = [1, 8, 8], strides = [1, 1, 1]} : vector<1x8x32xbf16> to vector<1x8x8xbf16>
    "tpu.trace_start"() <{level = 10 : i32, message = "bid,bjd->bij"}> : () -> ()
    %cst_11 = arith.constant dense<0.000000e+00> : vector<1x8x8xf32>
    %47 = tpu.matmul %44, %45, %cst_11 {dimension_numbers = #tpu.dot_dimension_numbers<[2], [2], [1], [1], [0, 0, 0, 1, 1, 1], [0], [0]>} : vector<1x8x8xbf16>, vector<1x8x8xbf16>, vector<1x8x8xf32> -> vector<1x8x8xf32>
    "tpu.trace_stop"() : () -> ()
    %cst_12 = arith.constant dense<0xFF800000> : vector<1x8xf32>
    %48 = vector.multi_reduction <maximumf>, %47, %cst_12 [2] : vector<1x8x8xf32> to vector<1x8xf32>
    %49 = vector.shape_cast %48 : vector<1x8xf32> to vector<1x8x1xf32>
    %50 = vector.broadcast %49 : vector<1x8x1xf32> to vector<1x8x8xf32>
    %51 = arith.subf %47, %50 : vector<1x8x8xf32>
    %52 = math.exp %51 : vector<1x8x8xf32>
    %cst_13 = arith.constant dense<0.000000e+00> : vector<1x8xf32>
    %53 = vector.multi_reduction <add>, %52, %cst_13 [2] : vector<1x8x8xf32> to vector<1x8xf32>
    %54 = vector.shape_cast %53 : vector<1x8xf32> to vector<1x8x1xf32>
    %55 = tpu.reciprocal %54 {approx = true} : vector<1x8x1xf32> -> vector<1x8x1xf32>
    %56 = vector.broadcast %55 : vector<1x8x1xf32> to vector<1x8x8xf32>
    %57 = arith.mulf %52, %56 : vector<1x8x8xf32>
    %58 = arith.truncf %57 : vector<1x8x8xf32> to vector<1x8x8xbf16>
    "tpu.trace_start"() <{level = 10 : i32, message = "bij,bjd->bid"}> : () -> ()
    %cst_14 = arith.constant dense<0.000000e+00> : vector<1x8x8xf32>
    %59 = tpu.matmul %58, %46, %cst_14 {dimension_numbers = #tpu.dot_dimension_numbers<[2], [1], [1], [2], [0, 0, 0, 1, 1, 2], [0], [0]>} : vector<1x8x8xbf16>, vector<1x8x8xbf16>, vector<1x8x8xf32> -> vector<1x8x8xf32>
    "tpu.trace_stop"() : () -> ()
    %60 = vector.extract_strided_slice %5 {offsets = [0, 0, 24], sizes = [1, 8, 8], strides = [1, 1, 1]} : vector<1x8x32xbf16> to vector<1x8x8xbf16>
    %61 = vector.extract_strided_slice %8 {offsets = [0, 0, 24], sizes = [1, 8, 8], strides = [1, 1, 1]} : vector<1x8x32xbf16> to vector<1x8x8xbf16>
    %62 = vector.extract_strided_slice %11 {offsets = [0, 0, 24], sizes = [1, 8, 8], strides = [1, 1, 1]} : vector<1x8x32xbf16> to vector<1x8x8xbf16>
    "tpu.trace_start"() <{level = 10 : i32, message = "bid,bjd->bij"}> : () -> ()
    %cst_15 = arith.constant dense<0.000000e+00> : vector<1x8x8xf32>
    %63 = tpu.matmul %60, %61, %cst_15 {dimension_numbers = #tpu.dot_dimension_numbers<[2], [2], [1], [1], [0, 0, 0, 1, 1, 1], [0], [0]>} : vector<1x8x8xbf16>, vector<1x8x8xbf16>, vector<1x8x8xf32> -> vector<1x8x8xf32>
    "tpu.trace_stop"() : () -> ()
    %cst_16 = arith.constant dense<0xFF800000> : vector<1x8xf32>
    %64 = vector.multi_reduction <maximumf>, %63, %cst_16 [2] : vector<1x8x8xf32> to vector<1x8xf32>
    %65 = vector.shape_cast %64 : vector<1x8xf32> to vector<1x8x1xf32>
    %66 = vector.broadcast %65 : vector<1x8x1xf32> to vector<1x8x8xf32>
    %67 = arith.subf %63, %66 : vector<1x8x8xf32>
    %68 = math.exp %67 : vector<1x8x8xf32>
    %cst_17 = arith.constant dense<0.000000e+00> : vector<1x8xf32>
    %69 = vector.multi_reduction <add>, %68, %cst_17 [2] : vector<1x8x8xf32> to vector<1x8xf32>
    %70 = vector.shape_cast %69 : vector<1x8xf32> to vector<1x8x1xf32>
    %71 = tpu.reciprocal %70 {approx = true} : vector<1x8x1xf32> -> vector<1x8x1xf32>
    %72 = vector.broadcast %71 : vector<1x8x1xf32> to vector<1x8x8xf32>
    %73 = arith.mulf %68, %72 : vector<1x8x8xf32>
    %74 = arith.truncf %73 : vector<1x8x8xf32> to vector<1x8x8xbf16>
    "tpu.trace_start"() <{level = 10 : i32, message = "bij,bjd->bid"}> : () -> ()
    %cst_18 = arith.constant dense<0.000000e+00> : vector<1x8x8xf32>
    %75 = tpu.matmul %74, %62, %cst_18 {dimension_numbers = #tpu.dot_dimension_numbers<[2], [1], [1], [2], [0, 0, 0, 1, 1, 2], [0], [0]>} : vector<1x8x8xbf16>, vector<1x8x8xbf16>, vector<1x8x8xf32> -> vector<1x8x8xf32>
    "tpu.trace_stop"() : () -> ()
    %76 = tpu.concatenate %27, %43, %59, %75 in 2 : vector<1x8x8xf32>, vector<1x8x8xf32>, vector<1x8x8xf32>, vector<1x8x8xf32> -> vector<1x8x32xf32>
    %77 = vector.shape_cast %76 : vector<1x8x32xf32> to vector<8x32xf32>
    %78 = arith.truncf %77 : vector<8x32xf32> to vector<8x32xbf16>
    %c0_19 = arith.constant 0 : index
    %c0_20 = arith.constant 0 : index
    %79 = vector.load %arg3[%c0_19, %c0_20] : memref<32x32xbf16, #tpu.memory_space<vmem>>, vector<32x32xbf16>
    %cst_21 = arith.constant dense<0.000000e+00> : vector<8x32xf32>
    %80 = tpu.matmul %78, %79, %cst_21 {dimension_numbers = #tpu.dot_dimension_numbers<[1], [0], [0], [1], [0, 0, 1, 1], [], []>} : vector<8x32xbf16>, vector<32x32xbf16>, vector<8x32xf32> -> vector<8x32xf32>
    %c0_22 = arith.constant 0 : index
    %c0_23 = arith.constant 0 : index
    %81 = vector.load %arg4[%c0_22, %c0_23] : memref<1x32xf32, #tpu.memory_space<vmem>>, vector<1x32xf32>
    %82 = vector.broadcast %81 : vector<1x32xf32> to vector<8x32xf32>
    %83 = arith.addf %80, %82 : vector<8x32xf32>
    %c0_24 = arith.constant 0 : index
    %c0_25 = arith.constant 0 : index
    %84 = vector.load %arg5[%c0_24, %c0_25] : memref<8x32xf32, #tpu.memory_space<vmem>>, vector<8x32xf32>
    tpu.vector_store %arg5[%c0_24, %c0_25], %83 {strides = array<i32>} : memref<8x32xf32, #tpu.memory_space<vmem>>, vector<8x32xf32>,
    return
  }
  func.func @transform_0(%arg0: i32) -> (i32, i32) {
    %c0_i32 = arith.constant 0 : i32
    %c0_i32_0 = arith.constant 0 : i32
    return %arg0, %c0_i32 : i32, i32
  }
  func.func @transform_1(%arg0: i32) -> (i32, i32) {
    %c0_i32 = arith.constant 0 : i32
    %c0_i32_0 = arith.constant 0 : i32
    %c0_i32_1 = arith.constant 0 : i32
    return %c0_i32, %c0_i32_0 : i32, i32
  }
  func.func @transform_2(%arg0: i32) -> (i32, i32) {
    %c0_i32 = arith.constant 0 : i32
    %c0_i32_0 = arith.constant 0 : i32
    %c0_i32_1 = arith.constant 0 : i32
    return %c0_i32, %c0_i32_0 : i32, i32
  }
  func.func @transform_3(%arg0: i32) -> (i32, i32) {
    %c0_i32 = arith.constant 0 : i32
    %c0_i32_0 = arith.constant 0 : i32
    %c0_i32_1 = arith.constant 0 : i32
    return %c0_i32, %c0_i32_0 : i32, i32
  }
  func.func @transform_4(%arg0: i32) -> (i32, i32) {
    %c0_i32 = arith.constant 0 : i32
    %c0_i32_0 = arith.constant 0 : i32
    return %arg0, %c0_i32 : i32, i32
  }
}

</mosaic_0001>

<llo_original>
// kernel: tpu_custom_call.1
$region0: #{tpu_custom_call.1}
  #allocation0 [shape = 'u32[]', space=smem, size = 0x4, offset = 0x4, fixed_abs, tag = 'smem constant byte address 0x4 - core index']
  #allocation1 [shape = 'u32[144,128]{1,0:T(1,128)}', space=vmem, size = 0x12000, scoped, tag = 'internal scratch']
  %s0 = inlined_call_operand.hbm [shape: bf16[16,32], index: 0, kind: input, shape index: {}]
  %s1 = inlined_call_operand.hbm [shape: bf16[32,96], index: 1, kind: input, shape index: {}]
  %s2 = inlined_call_operand.hbm [shape: bf16[32,32], index: 2, kind: input, shape index: {}]
  %s3 = inlined_call_operand.vmem [shape: f32[1,32], index: 3, kind: input, shape index: {}]
  %s4 = inlined_call_operand.hbm [shape: f32[16,32], index: 4, kind: output, shape index: {}]
  %s5 = sld [smem:[#allocation0]]
  $region61: #{tpu_custom_call.1} parent=0
    _
  %s7 = ssub.s32 1, %s5
  %s8 = scalar_select 0, %s7, %s5
  $region1: #{tpu_custom_call.1} parent=0
    #allocation2 [shape = 'u8[4096]{0}', space=vmem, size = 0x1000, scoped, tag = 'input window, operand 0']
    #allocation3 [shape = 's32[2]{0}', space=sflag, size = 0x8, scoped, tag = 'scoped memory for tpu_custom_call.1']
    #allocation4 [shape = 's32[2]{0}', space=sflag, size = 0x8, scoped, tag = 'scoped memory for tpu_custom_call.1']
    #allocation5 [shape = 'u8[8192]{0}', space=vmem, size = 0x2000, scoped, tag = 'input window, operand 1, single buffered']
    #allocation6 [shape = 's32[1]{0}', space=sflag, size = 0x4, scoped, tag = 'scoped memory for tpu_custom_call.1']
    #allocation7 [shape = 'u8[8192]{0}', space=vmem, size = 0x2000, scoped, tag = 'input window, operand 2, single buffered']
    #allocation8 [shape = 'u8[8192]{0}', space=vmem, size = 0x2000, scoped, tag = 'output window, operand 0']
    %9 = vsyncpa [#allocation3], 0
    %s10 = scalar_lea.sflag [#allocation3], 1
    %11 = vsyncpa %s10, 0
    %12 = vsyncpa [#allocation6], 0
    %13 = vsyncpa [#allocation4], 0
    %s14 = scalar_lea.sflag [#allocation4], 1
    %15 = vsyncpa %s14, 0
    loop: start=0, step=1, limit=4
    $region2: #{tpu_custom_call.1} parent=1 // loop_pre_header
      _
    $region3: #{tpu_custom_call.1} parent=1 // loop_header
      %s17 = sphi 0, %s21
      %p18 = scmp.ge.s32.totalorder %s17, 4
      %s27 = sphi 0, %s29
      %s30 = sphi 0, %s27
      %s31 = sphi 0, %s30
      %s47 = sphi 0, %s31
      %s51 = sphi 0, %s51
      %s53 = sphi 0, %s51
      %s54 = sphi 0, %s53
      %s68 = sphi 0, %s54
      %s72 = sphi 0, %s72
      %s74 = sphi 0, %s72
      %s75 = sphi 0, %s74
      %s89 = sphi 0, %s75
      %s93 = sphi 0, %s93
      %s95 = sphi 0, %s93
      %s96 = sphi 0, %s95
      %s110 = sphi 0, %s96
      %s116 = sphi 0, %s118
      %s119 = sphi 0, %s116
      %s120 = sphi 0, %s119
      %s136 = sphi 0, %s120
    $region4: #{tpu_custom_call.1} parent=1 // loop_header_branch
      %20 = sbr.rel (%p18) target = $region8
    $region5: #{tpu_custom_call.1} parent=1 // loop_body
      %s22 = ssub.s32 %s17, 1
      %s23 = ssub.s32 %s17, 2
      %s24 = sadd.s32 %s17, 1
      %s25 = ssub.s32 %s17, %s24
      %p26 = scmp.eq.s32.totalorder %s25, 0
      %s28 = sadd.s32 %s27, 1
      %s29 = scalar_select %p26, %s27, %s28
      %p32 = pneg %p26
      %p33 = scmp.eq.s32.totalorder %s17, 1
      %p34 = por %p32, %p33
      %p35 = scmp.ne.s32.totalorder %s27, %s30
      %p36 = scmp.eq.s32.totalorder %s17, 0
      %p37 = por %p35, %p36
      %p38 = scmp.ne.s32.totalorder %s27, %s30
      %p39 = scmp.eq.s32.totalorder %s22, 1
      %p40 = por %p38, %p39
      %p41 = scmp.ne.s32.totalorder %s30, %s31
      %p42 = scmp.eq.s32.totalorder %s22, 0
      %p43 = por %p41, %p42
      %p44 = scmp.ne.s32.totalorder %s30, %s31
      %p45 = scmp.eq.s32.totalorder %s23, 1
      %p46 = por %p44, %p45
      %p48 = scmp.ne.s32.totalorder %s31, %s47
      %p49 = scmp.eq.s32.totalorder %s23, 0
      %p50 = por %p48, %p49
      %s52 = sadd.s32 %s51, 1
      %p55 = scmp.eq.s32.totalorder %s17, 1
      %p56 = scmp.ne.s32.totalorder %s51, %s53
      %p57 = scmp.eq.s32.totalorder %s17, 0
      %p58 = por %p56, %p57
      %p59 = scmp.ne.s32.totalorder %s51, %s53
      %p60 = scmp.eq.s32.totalorder %s22, 1
      %p61 = por %p59, %p60
      %p62 = scmp.ne.s32.totalorder %s53, %s54
      %p63 = scmp.eq.s32.totalorder %s22, 0
      %p64 = por %p62, %p63
      %p65 = scmp.ne.s32.totalorder %s53, %s54
      %p66 = scmp.eq.s32.totalorder %s23, 1
      %p67 = por %p65, %p66
      %p69 = scmp.ne.s32.totalorder %s54, %s68
      %p70 = scmp.eq.s32.totalorder %s23, 0
      %p71 = por %p69, %p70
      %s73 = sadd.s32 %s72, 1
      %p76 = scmp.eq.s32.totalorder %s17, 1
      %p77 = scmp.ne.s32.totalorder %s72, %s74
      %p78 = scmp.eq.s32.totalorder %s17, 0
      %p79 = por %p77, %p78
      %p80 = scmp.ne.s32.totalorder %s72, %s74
      %p81 = scmp.eq.s32.totalorder %s22, 1
      %p82 = por %p80, %p81
      %p83 = scmp.ne.s32.totalorder %s74, %s75
      %p84 = scmp.eq.s32.totalorder %s22, 0
      %p85 = por %p83, %p84
      %p86 = scmp.ne.s32.totalorder %s74, %s75
      %p87 = scmp.eq.s32.totalorder %s23, 1
      %p88 = por %p86, %p87
      %p90 = scmp.ne.s32.totalorder %s75, %s89
      %p91 = scmp.eq.s32.totalorder %s23, 0
      %p92 = por %p90, %p91
      %s94 = sadd.s32 %s93, 1
      %p97 = scmp.eq.s32.totalorder %s17, 1
      %p98 = scmp.ne.s32.totalorder %s93, %s95
      %p99 = scmp.eq.s32.totalorder %s17, 0
      %p100 = por %p98, %p99
      %p101 = scmp.ne.s32.totalorder %s93, %s95
      %p102 = scmp.eq.s32.totalorder %s22, 1
      %p103 = por %p101, %p102
      %p104 = scmp.ne.s32.totalorder %s95, %s96
      %p105 = scmp.eq.s32.totalorder %s22, 0
      %p106 = por %p104, %p105
      %p107 = scmp.ne.s32.totalorder %s95, %s96
      %p108 = scmp.eq.s32.totalorder %s23, 1
      %p109 = por %p107, %p108
      %p111 = scmp.ne.s32.totalorder %s96, %s110
      %p112 = scmp.eq.s32.totalorder %s23, 0
      %p113 = por %p111, %p112
      %s114 = ssub.s32 %s17, %s24
      %p115 = scmp.eq.s32.totalorder %s114, 0
      %s117 = sadd.s32 %s116, 1
      %s118 = scalar_select %p115, %s116, %s117
      %p121 = pneg %p115
      %p122 = scmp.eq.s32.totalorder %s17, 1
      %p123 = por %p121, %p122
      %p124 = scmp.ne.s32.totalorder %s116, %s119
      %p125 = scmp.eq.s32.totalorder %s17, 0
      %p126 = por %p124, %p125
      %p127 = scmp.ne.s32.totalorder %s116, %s119
      %p128 = scmp.eq.s32.totalorder %s22, 1
      %p129 = por %p127, %p128
      %p130 = scmp.ne.s32.totalorder %s119, %s120
      %p131 = scmp.eq.s32.totalorder %s22, 0
      %p132 = por %p130, %p131
      %p133 = scmp.ne.s32.totalorder %s119, %s120
      %p134 = scmp.eq.s32.totalorder %s23, 1
      %p135 = por %p133, %p134
      %p137 = scmp.ne.s32.totalorder %s120, %s136
      %p138 = scmp.eq.s32.totalorder %s23, 0
      %p139 = por %p137, %p138
      %p140 = scmp.le.s32.totalorder 1, %s17
      %p141 = scmp.lt.s32.totalorder %s17, 3
      %p142 = pnand %p140, %p141
      %p143 = pneg %p142
      // Predicated region
      $region9: #{tpu_custom_call.1} parent=5 // pred_check
        _
      $region10: #{tpu_custom_call.1} parent=5 // pred_check_branch
        %145 = sbr.rel (%p142) target = $region12
      $region11: #{tpu_custom_call.1} parent=5 // pred_region
        %s146 = ssub.s32 %s17, 1
        // Predicated region
        $region13: #{tpu_custom_call.1} parent=11 // pred_check
          %p147 = pneg %p64
        $region14: #{tpu_custom_call.1} parent=11 // pred_check_branch
          %149 = sbr.rel (%p147) target = $region16
        $region15: #{tpu_custom_call.1} parent=11 // pred_region
          %s151 = ssub.s32 256, 256
          %152 = vsyncadd [#allocation6], %s151
          %s153 = sshll.u32 [#allocation5], 4
          %s154 = int_to_ptr.vmem [resolvable:$true] %s153
          %159 = dma.hbm_to_vmem [thread:$0]  %s1, 256, %s154, [#allocation6], 64, 64, 4
        $region16: #{tpu_custom_call.1} parent=11 // pred_fallthru
          _
        // Predicated region
        $region17: #{tpu_custom_call.1} parent=11 // pred_check
          %p160 = pneg %p85
        $region18: #{tpu_custom_call.1} parent=11 // pred_check_branch
          %162 = sbr.rel (%p160) target = $region20
        $region19: #{tpu_custom_call.1} parent=11 // pred_region
          %s164 = ssub.s32 256, 256
          %165 = vsyncadd [#allocation6], %s164
          %s166 = sshll.u32 [#allocation7], 4
          %s167 = int_to_ptr.vmem [resolvable:$true] %s166
          %172 = dma.hbm_to_vmem [thread:$0]  %s2, 256, %s167, [#allocation6], 64, 64, 4
        $region20: #{tpu_custom_call.1} parent=11 // pred_fallthru
          _
        // Predicated region
        $region21: #{tpu_custom_call.1} parent=11 // pred_check
          %p173 = pneg %p106
        $region22: #{tpu_custom_call.1} parent=11 // pred_check_branch
          %175 = sbr.rel (%p173) target = $region24
        $region23: #{tpu_custom_call.1} parent=11 // pred_region
          _
        $region24: #{tpu_custom_call.1} parent=11 // pred_fallthru
          _
      $region12: #{tpu_custom_call.1} parent=5 // pred_fallthru
        _
      %p176 = scmp.lt.s32.totalorder %s17, 2
      // Predicated region
      $region25: #{tpu_custom_call.1} parent=5 // pred_check
        %p177 = pneg %p176
      $region26: #{tpu_custom_call.1} parent=5 // pred_check_branch
        %179 = sbr.rel (%p177) target = $region28
      $region27: #{tpu_custom_call.1} parent=5 // pred_region
        // Predicated region
        $region29: #{tpu_custom_call.1} parent=27 // pred_check
          %p180 = pneg %p37
        $region30: #{tpu_custom_call.1} parent=27 // pred_check_branch
          %182 = sbr.rel (%p180) target = $region32
        $region31: #{tpu_custom_call.1} parent=27 // pred_region
          %s183 = sand.u32 %s27, 1
          %s184 = scalar_lea.sflag [#allocation3], %s183
          %s185 = sand.u32 %s27, 1
          %s186 = smul.addr %s185, 4
          %s187 = scalar_lea.vmem [#allocation2], %s186
          %s189 = ssub.s32 64, 64
          %190 = vsyncadd %s184, %s189
          %s191 = smul.addr %s17, 64
          %s192 = scalar_lea.hbm %s0, %s191
          %s194 = sshll.u32 %s187, 4
          %s195 = int_to_ptr.vmem [resolvable:$true] %s194
          %197 = dma.hbm_to_vmem [thread:$0]  %s192, 64, %s195, %s184
        $region32: #{tpu_custom_call.1} parent=27 // pred_fallthru
          _
      $region28: #{tpu_custom_call.1} parent=5 // pred_fallthru
        _
      %p198 = scmp.le.s32.totalorder 1, %s17
      %p199 = scmp.lt.s32.totalorder %s17, 3
      %p200 = pnand %p198, %p199
      %p201 = pneg %p200
      // Predicated region
      $region33: #{tpu_custom_call.1} parent=5 // pred_check
        _
      $region34: #{tpu_custom_call.1} parent=5 // pred_check_branch
        %203 = sbr.rel (%p200) target = $region36
      $region35: #{tpu_custom_call.1} parent=5 // pred_region
        %s204 = ssub.s32 %s17, 1
        %s205 = sand.u32 %s30, 1
        %s206 = scalar_lea.sflag [#allocation3], %s205
        %s207 = sand.u32 %s30, 1
        %s208 = smul.addr %s207, 4
        %s209 = scalar_lea.vmem [#allocation2], %s208
        // Predicated region
        $region37: #{tpu_custom_call.1} parent=35 // pred_check
          %p210 = pneg %p43
        $region38: #{tpu_custom_call.1} parent=35 // pred_check_branch
          %212 = sbr.rel (%p210) target = $region40
        $region39: #{tpu_custom_call.1} parent=35 // pred_region
          %213 = dma.done %s206, 64
        $region40: #{tpu_custom_call.1} parent=35 // pred_fallthru
          _
        // Predicated region
        $region41: #{tpu_custom_call.1} parent=35 // pred_check
          %p214 = pneg %p64
        $region42: #{tpu_custom_call.1} parent=35 // pred_check_branch
          %216 = sbr.rel (%p214) target = $region44
        $region43: #{tpu_custom_call.1} parent=35 // pred_region
          %217 = dma.done [#allocation6], 256
        $region44: #{tpu_custom_call.1} parent=35 // pred_fallthru
          _
        // Predicated region
        $region45: #{tpu_custom_call.1} parent=35 // pred_check
          %p218 = pneg %p85
        $region46: #{tpu_custom_call.1} parent=35 // pred_check_branch
          %220 = sbr.rel (%p218) target = $region48
        $region47: #{tpu_custom_call.1} parent=35 // pred_region
          %221 = dma.done [#allocation6], 256
        $region48: #{tpu_custom_call.1} parent=35 // pred_fallthru
          _
        %s222 = sand.u32 %s30, 1
        %s223 = scalar_lea.sflag [#allocation3], %s222
        %s224 = sand.u32 %s30, 1
        %s225 = smul.addr %s224, 4
        %s226 = scalar_lea.vmem [#allocation2], %s225
        %p227 = pneg %p43
        %p228 = pneg %p40
        %p229 = pneg %p64
        %p230 = pneg %p61
        %p231 = pneg %p85
        %p232 = pneg %p82
        %p233 = pneg %p106
        %p234 = pneg %p103
        %p235 = pneg %p132
        %p236 = pneg %p129
        %s237 = sand.u32 %s119, 1
        %s238 = scalar_lea.sflag [#allocation4], %s237
        %s239 = sand.u32 %s119, 1
        %s240 = smul.addr %s239, 8
        %s241 = scalar_lea.vmem [#allocation8], %s240
        %v243 = vld [vmem:[%s209] sm:$0xf]
        %v244 = vld [vmem:[#allocation5] sm:$0xf]
        %v245 = vld [vmem:[#allocation5 + $0x4] sm:$0xf]
        %v246 = vld [vmem:[#allocation5 + $0x8] sm:$0xf]
        %v247 = vld [vmem:[#allocation5 + $0xc] sm:$0xf]
        %v252 = vunpack.c.l.b16 %v244
        %v253 = vunpack.c.l.b16 %v245
        %v254 = vunpack.c.l.b16 %v246
        %v255 = vunpack.c.l.b16 %v247
        %v256 = vpack.c.b16 %v253, %v252
        %v257 = vpack.c.b16 %v255, %v254
        %vm260 = vcmask 261120
        %v262 = vsel %vm260, %v243, 0
        %264 = vmatprep.subr.bf16.mxu0 0
        %265 = vmatpush1.bf16.msra.mxu0 0
        %266 = vmatprep.subr.bf16.mxu0 0
        %267 = vmatpush1.bf16.msra.mxu0 0
        %268 = vmatprep.subr.bf16.mxu0 0
        %269 = vmatpush1.bf16.msra.mxu0 0
        %270 = vmatprep.subr.bf16.mxu0 0
        %271 = vmatpush1.bf16.msra.mxu0 0
        %272 = vmatprep.subr.bf16.mxu0 0
        %273 = vmatpush1.bf16.msra.mxu0 0
        %274 = vmatprep.subr.bf16.mxu0 0
        %275 = vmatpush1.bf16.msra.mxu0 0
        %276 = vmatprep.subr.bf16.mxu0 0
        %277 = vmatpush1.bf16.msra.mxu0 %v257
        %278 = vmatprep.subr.bf16.mxu0 0
        %279 = vmatpush1.bf16.msra.mxu0 %v256
        %280 = vmatprep.subr.bf16.mxu0 0
        %281 = vmatpush2.bf16.msra.mxu0 0
        %282 = vmatprep.subr.bf16.mxu0 0
        %283 = vmatpush2.bf16.msra.mxu0 0
        %284 = vmatprep.subr.bf16.mxu0 0
        %285 = vmatpush2.bf16.msra.mxu0 0
        %286 = vmatprep.subr.bf16.mxu0 0
        %287 = vmatpush2.bf16.msra.mxu0 0
        %288 = vmatprep.subr.bf16.mxu0 0
        %289 = vmatpush2.bf16.msra.mxu0 0
        %290 = vmatprep.subr.bf16.mxu0 0
        %291 = vmatpush2.bf16.msra.mxu0 0
        %292 = vmatprep.subr.bf16.mxu0 0
        %293 = vmatpush2.bf16.msra.mxu0 0
        %294 = vmatprep.subr.bf16.mxu0 0
        %295 = vmatpush2.bf16.msra.mxu0 0
        %296 = vmatprep.mubr.bf16.mxu0 0
        %297 = vmatmul.mubr.bf16.gmra.mxu0 %v262
        %v298 = vpop.f32.mrf.mxu0
        %v299 = vadd.f32 0.0, %v298
        %v300 = vpop.f32.mrf.mxu0
        %v301 = vpop.f32.mrf.mxu0
        %v302 = vpop.f32.mrf.mxu0
        %303 = vdwg.mxu0
        %v304 = vpack.c.bf16 %v299, %v299
        %306 = vrot.lane.b32.xlu0 %v304, 96
        %v307 = vpop.permute.xlu0 %306
        %vm308 = vcmask 64512
        %v310 = vsel %vm308, %v304, 0
        %v313 = vsel %vm308, %v307, 0
        %315 = vmatprep.subr.bf16.mxu0 0
        %316 = vmatpush1.bf16.xpose.msra.mxu0 0
        %317 = vmatprep.subr.bf16.mxu0 0
        %318 = vmatpush1.bf16.xpose.msra.mxu0 0
        %319 = vmatprep.subr.bf16.mxu0 0
        %320 = vmatpush1.bf16.xpose.msra.mxu0 0
        %321 = vmatprep.subr.bf16.mxu0 0
        %322 = vmatpush1.bf16.xpose.msra.mxu0 0
        %323 = vmatprep.subr.bf16.mxu0 0
        %324 = vmatpush1.bf16.xpose.msra.mxu0 0
        %325 = vmatprep.subr.bf16.mxu0 0
        %326 = vmatpush1.bf16.xpose.msra.mxu0 0
        %327 = vmatprep.subr.bf16.mxu0 0
        %328 = vmatpush1.bf16.xpose.msra.mxu0 0
        %329 = vmatprep.subr.bf16.mxu0 0
        %330 = vmatpush1.bf16.xpose.msra.mxu0 %v313
        %331 = vmatprep.subr.bf16.mxu0 0
        %332 = vmatpush2.bf16.xpose.msra.mxu0 0
        %333 = vmatprep.subr.bf16.mxu0 0
        %334 = vmatpush2.bf16.xpose.msra.mxu0 0
        %335 = vmatprep.subr.bf16.mxu0 0
        %336 = vmatpush2.bf16.xpose.msra.mxu0 0
        %337 = vmatprep.subr.bf16.mxu0 0
        %338 = vmatpush2.bf16.xpose.msra.mxu0 0
        %339 = vmatprep.subr.bf16.mxu0 0
        %340 = vmatpush2.bf16.xpose.msra.mxu0 0
        %341 = vmatprep.subr.bf16.mxu0 0
        %342 = vmatpush2.bf16.xpose.msra.mxu0 0
        %343 = vmatprep.subr.bf16.mxu0 0
        %344 = vmatpush2.bf16.xpose.msra.mxu0 0
        %345 = vmatprep.subr.bf16.mxu0 0
        %346 = vmatpush2.bf16.xpose.msra.mxu0 0
        %347 = vmatprep.mubr.bf16.mxu0 0
        %348 = vmatmul.mubr.bf16.gmra.mxu0 %v310
        %v349 = vpop.f32.mrf.mxu0
        %v350 = vadd.f32 0.0, %v349
        %v351 = vpop.f32.mrf.mxu0
        %v352 = vpop.f32.mrf.mxu0
        %v353 = vpop.f32.mrf.mxu0
        %354 = vdwg.mxu0
        %v355 = vsel %vm308, %v350, -inf
        %356 = vmax.xlane.f32.xlu0 %v355
        %v357 = vpop.xlane.xlu0 %356
        %v358 = vsub.f32 %v350, %v357
        %v359 = vmul.f32 %v358, 1.442695
        %v360 = vpow.pop %v359
        %v361 = vsel %vm308, %v360, 0.0
        %362 = vadd.xlane.f32.xlu0 %v361
        %v363 = vpop.xlane.xlu0 %362
        %v364 = vrcp.pop %v363
        %v365 = vmul.f32 %v360, %v364
        %v366 = vpack.c.bf16 %v365, %v365
        %367 = vrot.lane.b32.xlu0 %v304, 64
        %v368 = vpop.permute.xlu0 %367
        %v370 = vsel %vm308, %v366, 0
        %vm372 = vcmask 1043456
        %v374 = vsel %vm372, %v368, 0
        %376 = vmatprep.subr.bf16.mxu0 0
        %377 = vmatpush1.bf16.msra.mxu0 0
        %378 = vmatprep.subr.bf16.mxu0 0
        %379 = vmatpush1.bf16.msra.mxu0 0
        %380 = vmatprep.subr.bf16.mxu0 0
        %381 = vmatpush1.bf16.msra.mxu0 0
        %382 = vmatprep.subr.bf16.mxu0 0
        %383 = vmatpush1.bf16.msra.mxu0 0
        %384 = vmatprep.subr.bf16.mxu0 0
        %385 = vmatpush1.bf16.msra.mxu0 0
        %386 = vmatprep.subr.bf16.mxu0 0
        %387 = vmatpush1.bf16.msra.mxu0 0
        %388 = vmatprep.subr.bf16.mxu0 0
        %389 = vmatpush1.bf16.msra.mxu0 0
        %390 = vmatprep.subr.bf16.mxu0 0
        %391 = vmatpush1.bf16.msra.mxu0 %v374
        %392 = vmatprep.subr.bf16.mxu0 0
        %393 = vmatpush2.bf16.msra.mxu0 0
        %394 = vmatprep.subr.bf16.mxu0 0
        %395 = vmatpush2.bf16.msra.mxu0 0
        %396 = vmatprep.subr.bf16.mxu0 0
        %397 = vmatpush2.bf16.msra.mxu0 0
        %398 = vmatprep.subr.bf16.mxu0 0
        %399 = vmatpush2.bf16.msra.mxu0 0
        %400 = vmatprep.subr.bf16.mxu0 0
        %401 = vmatpush2.bf16.msra.mxu0 0
        %402 = vmatprep.subr.bf16.mxu0 0
        %403 = vmatpush2.bf16.msra.mxu0 0
        %404 = vmatprep.subr.bf16.mxu0 0
        %405 = vmatpush2.bf16.msra.mxu0 0
        %406 = vmatprep.subr.bf16.mxu0 0
        %407 = vmatpush2.bf16.msra.mxu0 0
        %408 = vmatprep.mubr.bf16.mxu0 0
        %409 = vmatmul.mubr.bf16.gmra.mxu0 %v370
        %v410 = vpop.f32.mrf.mxu0
        %v411 = vadd.f32 0.0, %v410
        %v412 = vpop.f32.mrf.mxu0
        %v413 = vpop.f32.mrf.mxu0
        %v414 = vpop.f32.mrf.mxu0
        %415 = vdwg.mxu0
        %416 = vrot.lane.b32.xlu0 %v304, 120
        %v417 = vpop.permute.xlu0 %416
        %418 = vrot.lane.b32.xlu0 %v304, 88
        %v419 = vpop.permute.xlu0 %418
        %v421 = vsel %vm308, %v417, 0
        %v424 = vsel %vm308, %v419, 0
        %426 = vmatprep.subr.bf16.mxu0 0
        %427 = vmatpush1.bf16.xpose.msra.mxu0 0
        %428 = vmatprep.subr.bf16.mxu0 0
        %429 = vmatpush1.bf16.xpose.msra.mxu0 0
        %430 = vmatprep.subr.bf16.mxu0 0
        %431 = vmatpush1.bf16.xpose.msra.mxu0 0
        %432 = vmatprep.subr.bf16.mxu0 0
        %433 = vmatpush1.bf16.xpose.msra.mxu0 0
        %434 = vmatprep.subr.bf16.mxu0 0
        %435 = vmatpush1.bf16.xpose.msra.mxu0 0
        %436 = vmatprep.subr.bf16.mxu0 0
        %437 = vmatpush1.bf16.xpose.msra.mxu0 0
        %438 = vmatprep.subr.bf16.mxu0 0
        %439 = vmatpush1.bf16.xpose.msra.mxu0 0
        %440 = vmatprep.subr.bf16.mxu0 0
        %441 = vmatpush1.bf16.xpose.msra.mxu0 %v424
        %442 = vmatprep.subr.bf16.mxu0 0
        %443 = vmatpush2.bf16.xpose.msra.mxu0 0
        %444 = vmatprep.subr.bf16.mxu0 0
        %445 = vmatpush2.bf16.xpose.msra.mxu0 0
        %446 = vmatprep.subr.bf16.mxu0 0
        %447 = vmatpush2.bf16.xpose.msra.mxu0 0
        %448 = vmatprep.subr.bf16.mxu0 0
        %449 = vmatpush2.bf16.xpose.msra.mxu0 0
        %450 = vmatprep.subr.bf16.mxu0 0
        %451 = vmatpush2.bf16.xpose.msra.mxu0 0
        %452 = vmatprep.subr.bf16.mxu0 0
        %453 = vmatpush2.bf16.xpose.msra.mxu0 0
        %454 = vmatprep.subr.bf16.mxu0 0
        %455 = vmatpush2.bf16.xpose.msra.mxu0 0
        %456 = vmatprep.subr.bf16.mxu0 0
        %457 = vmatpush2.bf16.xpose.msra.mxu0 0
        %458 = vmatprep.mubr.bf16.mxu0 0
        %459 = vmatmul.mubr.bf16.gmra.mxu0 %v421
        %v460 = vpop.f32.mrf.mxu0
        %v461 = vadd.f32 0.0, %v460
        %v462 = vpop.f32.mrf.mxu0
        %v463 = vpop.f32.mrf.mxu0
        %v464 = vpop.f32.mrf.mxu0
        %465 = vdwg.mxu0
        %v466 = vsel %vm308, %v461, -inf
        %467 = vmax.xlane.f32.xlu0 %v466
        %v468 = vpop.xlane.xlu0 %467
        %v469 = vsub.f32 %v461, %v468
        %v470 = vmul.f32 %v469, 1.442695
        %v471 = vpow.pop %v470
        %v472 = vsel %vm308, %v471, 0.0
        %473 = vadd.xlane.f32.xlu0 %v472
        %v474 = vpop.xlane.xlu0 %473
        %v475 = vrcp.pop %v474
        %v476 = vmul.f32 %v471, %v475
        %v477 = vpack.c.bf16 %v476, %v476
        %478 = vrot.lane.b32.xlu0 %v304, 56
        %v479 = vpop.permute.xlu0 %478
        %v481 = vsel %vm308, %v477, 0
        %v484 = vsel %vm372, %v479, 0
        %486 = vmatprep.subr.bf16.mxu0 0
        %487 = vmatpush1.bf16.msra.mxu0 0
        %488 = vmatprep.subr.bf16.mxu0 0
        %489 = vmatpush1.bf16.msra.mxu0 0
        %490 = vmatprep.subr.bf16.mxu0 0
        %491 = vmatpush1.bf16.msra.mxu0 0
        %492 = vmatprep.subr.bf16.mxu0 0
        %493 = vmatpush1.bf16.msra.mxu0 0
        %494 = vmatprep.subr.bf16.mxu0 0
        %495 = vmatpush1.bf16.msra.mxu0 0
        %496 = vmatprep.subr.bf16.mxu0 0
        %497 = vmatpush1.bf16.msra.mxu0 0
        %498 = vmatprep.subr.bf16.mxu0 0
        %499 = vmatpush1.bf16.msra.mxu0 0
        %500 = vmatprep.subr.bf16.mxu0 0
        %501 = vmatpush1.bf16.msra.mxu0 %v484
        %502 = vmatprep.subr.bf16.mxu0 0
        %503 = vmatpush2.bf16.msra.mxu0 0
        %504 = vmatprep.subr.bf16.mxu0 0
        %505 = vmatpush2.bf16.msra.mxu0 0
        %506 = vmatprep.subr.bf16.mxu0 0
        %507 = vmatpush2.bf16.msra.mxu0 0
        %508 = vmatprep.subr.bf16.mxu0 0
        %509 = vmatpush2.bf16.msra.mxu0 0
        %510 = vmatprep.subr.bf16.mxu0 0
        %511 = vmatpush2.bf16.msra.mxu0 0
        %512 = vmatprep.subr.bf16.mxu0 0
        %513 = vmatpush2.bf16.msra.mxu0 0
        %514 = vmatprep.subr.bf16.mxu0 0
        %515 = vmatpush2.bf16.msra.mxu0 0
        %516 = vmatprep.subr.bf16.mxu0 0
        %517 = vmatpush2.bf16.msra.mxu0 0
        %518 = vmatprep.mubr.bf16.mxu0 0
        %519 = vmatmul.mubr.bf16.gmra.mxu0 %v481
        %v520 = vpop.f32.mrf.mxu0
        %v521 = vadd.f32 0.0, %v520
        %v522 = vpop.f32.mrf.mxu0
        %v523 = vpop.f32.mrf.mxu0
        %v524 = vpop.f32.mrf.mxu0
        %525 = vdwg.mxu0
        %526 = vrot.lane.b32.xlu0 %v304, 112
        %v527 = vpop.permute.xlu0 %526
        %528 = vrot.lane.b32.xlu0 %v304, 80
        %v529 = vpop.permute.xlu0 %528
        %v531 = vsel %vm308, %v527, 0
        %v534 = vsel %vm308, %v529, 0
        %536 = vmatprep.subr.bf16.mxu0 0
        %537 = vmatpush1.bf16.xpose.msra.mxu0 0
        %538 = vmatprep.subr.bf16.mxu0 0
        %539 = vmatpush1.bf16.xpose.msra.mxu0 0
        %540 = vmatprep.subr.bf16.mxu0 0
        %541 = vmatpush1.bf16.xpose.msra.mxu0 0
        %542 = vmatprep.subr.bf16.mxu0 0
        %543 = vmatpush1.bf16.xpose.msra.mxu0 0
        %544 = vmatprep.subr.bf16.mxu0 0
        %545 = vmatpush1.bf16.xpose.msra.mxu0 0
        %546 = vmatprep.subr.bf16.mxu0 0
        %547 = vmatpush1.bf16.xpose.msra.mxu0 0
        %548 = vmatprep.subr.bf16.mxu0 0
        %549 = vmatpush1.bf16.xpose.msra.mxu0 0
        %550 = vmatprep.subr.bf16.mxu0 0
        %551 = vmatpush1.bf16.xpose.msra.mxu0 %v534
        %552 = vmatprep.subr.bf16.mxu0 0
        %553 = vmatpush2.bf16.xpose.msra.mxu0 0
        %554 = vmatprep.subr.bf16.mxu0 0
        %555 = vmatpush2.bf16.xpose.msra.mxu0 0
        %556 = vmatprep.subr.bf16.mxu0 0
        %557 = vmatpush2.bf16.xpose.msra.mxu0 0
        %558 = vmatprep.subr.bf16.mxu0 0
        %559 = vmatpush2.bf16.xpose.msra.mxu0 0
        %560 = vmatprep.subr.bf16.mxu0 0
        %561 = vmatpush2.bf16.xpose.msra.mxu0 0
        %562 = vmatprep.subr.bf16.mxu0 0
        %563 = vmatpush2.bf16.xpose.msra.mxu0 0
        %564 = vmatprep.subr.bf16.mxu0 0
        %565 = vmatpush2.bf16.xpose.msra.mxu0 0
        %566 = vmatprep.subr.bf16.mxu0 0
        %567 = vmatpush2.bf16.xpose.msra.mxu0 0
        %568 = vmatprep.mubr.bf16.mxu0 0
        %569 = vmatmul.mubr.bf16.gmra.mxu0 %v531
        %v570 = vpop.f32.mrf.mxu0
        %v571 = vadd.f32 0.0, %v570
        %v572 = vpop.f32.mrf.mxu0
        %v573 = vpop.f32.mrf.mxu0
        %v574 = vpop.f32.mrf.mxu0
        %575 = vdwg.mxu0
        %v576 = vsel %vm308, %v571, -inf
        %577 = vmax.xlane.f32.xlu0 %v576
        %v578 = vpop.xlane.xlu0 %577
        %v579 = vsub.f32 %v571, %v578
        %v580 = vmul.f32 %v579, 1.442695
        %v581 = vpow.pop %v580
        %v582 = vsel %vm308, %v581, 0.0
        %583 = vadd.xlane.f32.xlu0 %v582
        %v584 = vpop.xlane.xlu0 %583
        %v585 = vrcp.pop %v584
        %v586 = vmul.f32 %v581, %v585
        %v587 = vpack.c.bf16 %v586, %v586
        %588 = vrot.lane.b32.xlu0 %v304, 48
        %v589 = vpop.permute.xlu0 %588
        %v591 = vsel %vm308, %v587, 0
        %v594 = vsel %vm372, %v589, 0
        %596 = vmatprep.subr.bf16.mxu0 0
        %597 = vmatpush1.bf16.msra.mxu0 0
        %598 = vmatprep.subr.bf16.mxu0 0
        %599 = vmatpush1.bf16.msra.mxu0 0
        %600 = vmatprep.subr.bf16.mxu0 0
        %601 = vmatpush1.bf16.msra.mxu0 0
        %602 = vmatprep.subr.bf16.mxu0 0
        %603 = vmatpush1.bf16.msra.mxu0 0
        %604 = vmatprep.subr.bf16.mxu0 0
        %605 = vmatpush1.bf16.msra.mxu0 0
        %606 = vmatprep.subr.bf16.mxu0 0
        %607 = vmatpush1.bf16.msra.mxu0 0
        %608 = vmatprep.subr.bf16.mxu0 0
        %609 = vmatpush1.bf16.msra.mxu0 0
        %610 = vmatprep.subr.bf16.mxu0 0
        %611 = vmatpush1.bf16.msra.mxu0 %v594
        %612 = vmatprep.subr.bf16.mxu0 0
        %613 = vmatpush2.bf16.msra.mxu0 0
        %614 = vmatprep.subr.bf16.mxu0 0
        %615 = vmatpush2.bf16.msra.mxu0 0
        %616 = vmatprep.subr.bf16.mxu0 0
        %617 = vmatpush2.bf16.msra.mxu0 0
        %618 = vmatprep.subr.bf16.mxu0 0
        %619 = vmatpush2.bf16.msra.mxu0 0
        %620 = vmatprep.subr.bf16.mxu0 0
        %621 = vmatpush2.bf16.msra.mxu0 0
        %622 = vmatprep.subr.bf16.mxu0 0
        %623 = vmatpush2.bf16.msra.mxu0 0
        %624 = vmatprep.subr.bf16.mxu0 0
        %625 = vmatpush2.bf16.msra.mxu0 0
        %626 = vmatprep.subr.bf16.mxu0 0
        %627 = vmatpush2.bf16.msra.mxu0 0
        %628 = vmatprep.mubr.bf16.mxu0 0
        %629 = vmatmul.mubr.bf16.gmra.mxu0 %v591
        %v630 = vpop.f32.mrf.mxu0
        %v631 = vadd.f32 0.0, %v630
        %v632 = vpop.f32.mrf.mxu0
        %v633 = vpop.f32.mrf.mxu0
        %v634 = vpop.f32.mrf.mxu0
        %635 = vdwg.mxu0
        %636 = vrot.lane.b32.xlu0 %v304, 104
        %v637 = vpop.permute.xlu0 %636
        %638 = vrot.lane.b32.xlu0 %v304, 72
        %v639 = vpop.permute.xlu0 %638
        %v641 = vsel %vm308, %v637, 0
        %v644 = vsel %vm308, %v639, 0
        %646 = vmatprep.subr.bf16.mxu0 0
        %647 = vmatpush1.bf16.xpose.msra.mxu0 0
        %648 = vmatprep.subr.bf16.mxu0 0
        %649 = vmatpush1.bf16.xpose.msra.mxu0 0
        %650 = vmatprep.subr.bf16.mxu0 0
        %651 = vmatpush1.bf16.xpose.msra.mxu0 0
        %652 = vmatprep.subr.bf16.mxu0 0
        %653 = vmatpush1.bf16.xpose.msra.mxu0 0
        %654 = vmatprep.subr.bf16.mxu0 0
        %655 = vmatpush1.bf16.xpose.msra.mxu0 0
        %656 = vmatprep.subr.bf16.mxu0 0
        %657 = vmatpush1.bf16.xpose.msra.mxu0 0
        %658 = vmatprep.subr.bf16.mxu0 0
        %659 = vmatpush1.bf16.xpose.msra.mxu0 0
        %660 = vmatprep.subr.bf16.mxu0 0
        %661 = vmatpush1.bf16.xpose.msra.mxu0 %v644
        %662 = vmatprep.subr.bf16.mxu0 0
        %663 = vmatpush2.bf16.xpose.msra.mxu0 0
        %664 = vmatprep.subr.bf16.mxu0 0
        %665 = vmatpush2.bf16.xpose.msra.mxu0 0
        %666 = vmatprep.subr.bf16.mxu0 0
        %667 = vmatpush2.bf16.xpose.msra.mxu0 0
        %668 = vmatprep.subr.bf16.mxu0 0
        %669 = vmatpush2.bf16.xpose.msra.mxu0 0
        %670 = vmatprep.subr.bf16.mxu0 0
        %671 = vmatpush2.bf16.xpose.msra.mxu0 0
        %672 = vmatprep.subr.bf16.mxu0 0
        %673 = vmatpush2.bf16.xpose.msra.mxu0 0
        %674 = vmatprep.subr.bf16.mxu0 0
        %675 = vmatpush2.bf16.xpose.msra.mxu0 0
        %676 = vmatprep.subr.bf16.mxu0 0
        %677 = vmatpush2.bf16.xpose.msra.mxu0 0
        %678 = vmatprep.mubr.bf16.mxu0 0
        %679 = vmatmul.mubr.bf16.gmra.mxu0 %v641
        %v680 = vpop.f32.mrf.mxu0
        %v681 = vadd.f32 0.0, %v680
        %v682 = vpop.f32.mrf.mxu0
        %v683 = vpop.f32.mrf.mxu0
        %v684 = vpop.f32.mrf.mxu0
        %685 = vdwg.mxu0
        %v686 = vsel %vm308, %v681, -inf
        %687 = vmax.xlane.f32.xlu0 %v686
        %v688 = vpop.xlane.xlu0 %687
        %v689 = vsub.f32 %v681, %v688
        %v690 = vmul.f32 %v689, 1.442695
        %v691 = vpow.pop %v690
        %v692 = vsel %vm308, %v691, 0.0
        %693 = vadd.xlane.f32.xlu0 %v692
        %v694 = vpop.xlane.xlu0 %693
        %v695 = vrcp.pop %v694
        %v696 = vmul.f32 %v691, %v695
        %v697 = vpack.c.bf16 %v696, %v696
        %698 = vrot.lane.b32.xlu0 %v304, 40
        %v699 = vpop.permute.xlu0 %698
        %v701 = vsel %vm308, %v697, 0
        %v704 = vsel %vm372, %v699, 0
        %706 = vmatprep.subr.bf16.mxu0 0
        %707 = vmatpush1.bf16.msra.mxu0 0
        %708 = vmatprep.subr.bf16.mxu0 0
        %709 = vmatpush1.bf16.msra.mxu0 0
        %710 = vmatprep.subr.bf16.mxu0 0
        %711 = vmatpush1.bf16.msra.mxu0 0
        %712 = vmatprep.subr.bf16.mxu0 0
        %713 = vmatpush1.bf16.msra.mxu0 0
        %714 = vmatprep.subr.bf16.mxu0 0
        %715 = vmatpush1.bf16.msra.mxu0 0
        %716 = vmatprep.subr.bf16.mxu0 0
        %717 = vmatpush1.bf16.msra.mxu0 0
        %718 = vmatprep.subr.bf16.mxu0 0
        %719 = vmatpush1.bf16.msra.mxu0 0
        %720 = vmatprep.subr.bf16.mxu0 0
        %721 = vmatpush1.bf16.msra.mxu0 %v704
        %722 = vmatprep.subr.bf16.mxu0 0
        %723 = vmatpush2.bf16.msra.mxu0 0
        %724 = vmatprep.subr.bf16.mxu0 0
        %725 = vmatpush2.bf16.msra.mxu0 0
        %726 = vmatprep.subr.bf16.mxu0 0
        %727 = vmatpush2.bf16.msra.mxu0 0
        %728 = vmatprep.subr.bf16.mxu0 0
        %729 = vmatpush2.bf16.msra.mxu0 0
        %730 = vmatprep.subr.bf16.mxu0 0
        %731 = vmatpush2.bf16.msra.mxu0 0
        %732 = vmatprep.subr.bf16.mxu0 0
        %733 = vmatpush2.bf16.msra.mxu0 0
        %734 = vmatprep.subr.bf16.mxu0 0
        %735 = vmatpush2.bf16.msra.mxu0 0
        %736 = vmatprep.subr.bf16.mxu0 0
        %737 = vmatpush2.bf16.msra.mxu0 0
        %738 = vmatprep.mubr.bf16.mxu0 0
        %739 = vmatmul.mubr.bf16.gmra.mxu0 %v701
        %v740 = vpop.f32.mrf.mxu0
        %v741 = vadd.f32 0.0, %v740
        %v742 = vpop.f32.mrf.mxu0
        %v743 = vpop.f32.mrf.mxu0
        %v744 = vpop.f32.mrf.mxu0
        %745 = vdwg.mxu0
        %747 = vrot.lane.b32.xlu0 %v521, 8
        %v748 = vpop.permute.xlu0 %747
        %751 = vrot.lane.b32.xlu0 %v631, 16
        %v752 = vpop.permute.xlu0 %751
        %755 = vrot.lane.b32.xlu0 %v741, 24
        %v756 = vpop.permute.xlu0 %755
        %v758 = vsel %vm308, %v411, %v748
        %vm759 = vcmask 130048
        %v760 = vsel %vm759, %v758, %v752
        %vm761 = vcmask 195584
        %v762 = vsel %vm761, %v760, %v756
        %v763 = vpack.c.bf16 %v762, %v762
        %v764 = vld [vmem:[#allocation7] sm:$0xf]
        %v765 = vld [vmem:[#allocation7 + $0x4] sm:$0xf]
        %v766 = vld [vmem:[#allocation7 + $0x8] sm:$0xf]
        %v767 = vld [vmem:[#allocation7 + $0xc] sm:$0xf]
        %v768 = vld [vmem:[%s3] sm:$0x1]
        %v770 = vlaneseq
        %v771 = vshrl.u32 %v770, 7
        %v772 = vsub.s32 0, %v771
        %v773 = vrot.slane %v768, %v772
        %v779 = vunpack.c.l.b16 %v764
        %v780 = vunpack.c.l.b16 %v765
        %v781 = vunpack.c.l.b16 %v766
        %v782 = vunpack.c.l.b16 %v767
        %v783 = vpack.c.b16 %v780, %v779
        %v784 = vpack.c.b16 %v782, %v781
        %v788 = vsel %vm260, %v763, 0
        %790 = vmatprep.subr.bf16.mxu0 0
        %791 = vmatpush1.bf16.msra.mxu0 0
        %792 = vmatprep.subr.bf16.mxu0 0
        %793 = vmatpush1.bf16.msra.mxu0 0
        %794 = vmatprep.subr.bf16.mxu0 0
        %795 = vmatpush1.bf16.msra.mxu0 0
        %796 = vmatprep.subr.bf16.mxu0 0
        %797 = vmatpush1.bf16.msra.mxu0 0
        %798 = vmatprep.subr.bf16.mxu0 0
        %799 = vmatpush1.bf16.msra.mxu0 0
        %800 = vmatprep.subr.bf16.mxu0 0
        %801 = vmatpush1.bf16.msra.mxu0 0
        %802 = vmatprep.subr.bf16.mxu0 0
        %803 = vmatpush1.bf16.msra.mxu0 %v784
        %804 = vmatprep.subr.bf16.mxu0 0
        %805 = vmatpush1.bf16.msra.mxu0 %v783
        %806 = vmatprep.subr.bf16.mxu0 0
        %807 = vmatpush2.bf16.msra.mxu0 0
        %808 = vmatprep.subr.bf16.mxu0 0
        %809 = vmatpush2.bf16.msra.mxu0 0
        %810 = vmatprep.subr.bf16.mxu0 0
        %811 = vmatpush2.bf16.msra.mxu0 0
        %812 = vmatprep.subr.bf16.mxu0 0
        %813 = vmatpush2.bf16.msra.mxu0 0
        %814 = vmatprep.subr.bf16.mxu0 0
        %815 = vmatpush2.bf16.msra.mxu0 0
        %816 = vmatprep.subr.bf16.mxu0 0
        %817 = vmatpush2.bf16.msra.mxu0 0
        %818 = vmatprep.subr.bf16.mxu0 0
        %819 = vmatpush2.bf16.msra.mxu0 0
        %820 = vmatprep.subr.bf16.mxu0 0
        %821 = vmatpush2.bf16.msra.mxu0 0
        %822 = vmatprep.mubr.bf16.mxu0 0
        %823 = vmatmul.mubr.bf16.gmra.mxu0 %v788
        %v824 = vpop.f32.mrf.mxu0
        %v825 = vadd.f32 %v773, %v824
        %v826 = vpop.f32.mrf.mxu0
        %v827 = vpop.f32.mrf.mxu0
        %v828 = vpop.f32.mrf.mxu0
        %829 = vdwg.mxu0
        %830 = vst.msk [vmem:[%s241] sm:$0xff] %vm260, %v825
        %s831 = sand.u32 %s119, 1
        %s832 = scalar_lea.sflag [#allocation4], %s831
        %s833 = sand.u32 %s119, 1
        %s834 = smul.addr %s833, 8
        %s835 = scalar_lea.vmem [#allocation8], %s834
        // Predicated region
        $region49: #{tpu_custom_call.1} parent=35 // pred_check
          %p836 = pneg %p129
        $region50: #{tpu_custom_call.1} parent=35 // pred_check_branch
          %838 = sbr.rel (%p836) target = $region52
        $region51: #{tpu_custom_call.1} parent=35 // pred_region
          %s840 = ssub.s32 128, 128
          %841 = vsyncadd %s832, %s840
          %s842 = smul.addr %s22, 128
          %s843 = scalar_lea.hbm %s4, %s842
          %s845 = sshll.u32 %s835, 4
          %s846 = int_to_ptr.vmem [resolvable:$true] %s845
          %848 = dma.vmem_to_hbm [thread:$0]  %s846, 128, %s843, %s832
        $region52: #{tpu_custom_call.1} parent=35 // pred_fallthru
          _
      $region36: #{tpu_custom_call.1} parent=5 // pred_fallthru
        _
      %p849 = scmp.le.s32.totalorder 2, %s17
      // Predicated region
      $region53: #{tpu_custom_call.1} parent=5 // pred_check
        %p850 = pneg %p849
      $region54: #{tpu_custom_call.1} parent=5 // pred_check_branch
        %852 = sbr.rel (%p850) target = $region56
      $region55: #{tpu_custom_call.1} parent=5 // pred_region
        %s853 = ssub.s32 %s17, 2
        // Predicated region
        $region57: #{tpu_custom_call.1} parent=55 // pred_check
          %p854 = pneg %p135
        $region58: #{tpu_custom_call.1} parent=55 // pred_check_branch
          %856 = sbr.rel (%p854) target = $region60
        $region59: #{tpu_custom_call.1} parent=55 // pred_region
          %s857 = sand.u32 %s120, 1
          %s858 = scalar_lea.sflag [#allocation4], %s857
          %s859 = sand.u32 %s120, 1
          %s860 = smul.addr %s859, 8
          %s861 = scalar_lea.vmem [#allocation8], %s860
          %862 = dma.done %s858, 128
        $region60: #{tpu_custom_call.1} parent=55 // pred_fallthru
          _
      $region56: #{tpu_custom_call.1} parent=5 // pred_fallthru
        _
    $region6: #{tpu_custom_call.1} parent=1 // loop_footer
      %s21 = sadd.s32 1, %s17
    $region7: #{tpu_custom_call.1} parent=1 // loop_footer_branch
      %16 = sbr.rel target = $region3
    $region8: #{tpu_custom_call.1} parent=1 // loop_exit
      _
    %863 = vsyncpa [#allocation3], 1
    %s864 = scalar_lea.sflag [#allocation3], 1
    %865 = vsyncpa %s864, 1
    %866 = vsyncpa [#allocation6], 1
    %867 = vsyncpa [#allocation4], 1
    %s868 = scalar_lea.sflag [#allocation4], 1
    %869 = vsyncpa %s868, 1

</llo_original>
